<compile_context>
chip_gen: v6e
topology: v6e:2x2x1
jax: 0.10.0
libtpu: 0.0.40
codegen_flags: <defaults>
</compile_context>

<pallas_src>
import math

import jax
import jax.numpy as jnp
from jax.experimental import pallas as pl
from jax.experimental.pallas import tpu as pltpu

_K0 = math.sqrt(2.0 / math.pi)       # sqrt(2/pi)
_K1 = _K0 * 0.044715                 # fused: sqrt(2/pi) * 0.044715


def _gelu_kernel(x_ref, o_ref):
    # f32 internal compute regardless of storage dtype (matches PyTorch float
    # math for bf16; the op is HBM-bound so the extra VALU work is hidden).
    x = x_ref[...].astype(jnp.float32)
    x2 = x * x
    inner = x * (_K0 + _K1 * x2)                  # == sqrt(2/pi)*(x + 0.044715*x^3)
    y = (0.5 * x) * (1.0 + jnp.tanh(inner))       # tanh -> EUP slot (free-ish)
    o_ref[...] = y.astype(o_ref.dtype)


def _lane_dense_slab(total: int, hidden: int) -> tuple:
    """Pick (rows, cols) with rows*cols == total; cols lane-dense if possible."""
    if hidden > 0 and hidden % 128 == 0:
        # Already lane-dense; merging the leading dims is a free reshape.
        return total // hidden, hidden
    if total % 128 == 0:
        # Elementwise op: any factorization is valid. Grow cols (powers of 2)
        # while they divide the total, capped at 512*128 lanes per row.
        cols = 128
        while cols * 2 <= 512 * 128 and total % (cols * 2) == 0:
            cols *= 2
        return total // cols, cols
    # Fallback: keep native last dim (full-dim block; masked partial stores).
    return max(1, total // max(1, hidden)), max(1, hidden)


def _vmem_budget() -> tuple:
    """(vmem_limit_bytes, per-tile byte budget), sized per TPU generation."""
    try:
        info = pltpu.get_tpu_info()
        phys = getattr(info, "vmem_capacity_bytes", None) or (64 << 20)
    except Exception:
        phys = 64 << 20                          # conservative (v7x-sized) default
    vmem_limit = min(phys // 2, 64 << 20)        # 64 MiB on v5e/v6e, 32 MiB on v7x
    # 2 input + 2 output pipeline buffers per tile, plus headroom.
    tile_budget = min(vmem_limit // 6, 8 << 20)
    return vmem_limit, tile_budget


def _choose_block_rows(rows: int, cols: int, itemsize: int,
                       tile_budget: int, sublane: int) -> int:
    if rows <= sublane:
        return rows                              # block == full first dim
    row_bytes = max(1, cols * itemsize)
    tm = max(sublane, (tile_budget // row_bytes) // sublane * sublane)
    tm = min(tm, rows)
    # Keep >= 2 grid blocks when there's enough work so v7x can shard the
    # parallel axis across its 2 TensorCores (pure win; no-op on v5e/v6e).
    if tm >= rows and rows >= 2 * sublane:
        half = (rows + 1) // 2
        tm = ((half + sublane - 1) // sublane) * sublane
        if tm >= rows:
            tm = max(sublane, (rows // 2) // sublane * sublane)
        tm = min(tm, rows)
    return tm


def gelu(x: jax.Array) -> jax.Array:
    """Tanh-approximation GELU matching the PyTorch module's forward."""
    orig_shape = x.shape
    total = x.size
    if total == 0:
        return x
    hidden = orig_shape[-1] if x.ndim >= 1 else 1
    itemsize = jnp.dtype(x.dtype).itemsize
    sublane = 8 * max(1, 4 // itemsize)          # 8 (f32) / 16 (bf16) / 32 (i8)

    rows, cols = _lane_dense_slab(total, hidden)
    x2d = x.reshape(rows, cols)

    vmem_limit, tile_budget = _vmem_budget()
    tm = _choose_block_rows(rows, cols, itemsize, tile_budget, sublane)

    # TODO(synk): if a profile ever shows exposed DMA after tile sizing, add
    # pipeline_mode=pl.Buffered(3) on the input spec (costs VMEM; do last).
    out = pl.pallas_call(
        _gelu_kernel,
        out_shape=jax.ShapeDtypeStruct((rows, cols), x.dtype),
        grid_spec=pltpu.PrefetchScalarGridSpec(
            num_scalar_prefetch=0,
            grid=(pl.cdiv(rows, tm),),           # ragged last block is masked
            in_specs=[pl.BlockSpec((tm, cols), lambda i: (i, 0))],
            out_specs=pl.BlockSpec((tm, cols), lambda i: (i, 0)),
        ),
        compiler_params=pltpu.CompilerParams(
            dimension_semantics=("parallel",),
            vmem_limit_bytes=int(vmem_limit),
        ),
    )(x2d)
    return out.reshape(orig_shape)


def gelu_ref(x: jax.Array) -> jax.Array:
    xf = x.astype(jnp.float32)
    c = math.sqrt(2.0 / math.pi)
    y = 0.5 * xf * (1.0 + jnp.tanh(c * (xf + 0.044715 * jnp.power(xf, 3))))
    return y.astype(x.dtype)


if __name__ == "__main__":
    key = jax.random.PRNGKey(0)
    k1, k2 = jax.random.split(key)

    # Primary check: transformer-style activation (batch, seq, hidden).
    x = jax.random.normal(key, (2, 8, 32), dtype=jnp.float32)
    y = jax.block_until_ready(gelu(x))
    assert y.shape == x.shape and y.dtype == x.dtype
    assert jnp.allclose(y, gelu_ref(x), atol=1e-5, rtol=1e-5), "f32 mismatch"

    # 128-aligned hidden: free lane-dense reshape + multi-block grid.
    xa = jax.random.normal(k1, (4, 8, 128), dtype=jnp.float32)
    ya = jax.block_until_ready(gelu(xa))
    assert jnp.allclose(ya, gelu_ref(xa), atol=1e-5, rtol=1e-5), "aligned mismatch"

    # bf16 input: f32 internal compute, cast on store.
    xb = jax.random.normal(k2, (2, 8, 32), dtype=jnp.bfloat16)
    yb = jax.block_until_ready(gelu(xb))
    assert yb.dtype == jnp.bfloat16
    assert jnp.allclose(yb.astype(jnp.float32), gelu_ref(xb).astype(jnp.float32),
                        atol=2e-2, rtol=2e-2), "bf16 mismatch"

    # Odd shape (total not divisible by 128): full-array block fallback.
    xc = jax.random.normal(k2, (3, 5, 7), dtype=jnp.float32)
    yc = jax.block_until_ready(gelu(xc))
    assert jnp.allclose(yc, gelu_ref(xc), atol=1e-5, rtol=1e-5), "fallback mismatch"

    print("KERNEL_OK")
</pallas_src>

<mosaic_0001>
module attributes {stable_mosaic.version = 11 : i64} {
  func.func @_gelu_kernel(%arg0: i32, %arg1: memref<1x512xf32, #tpu.memory_space<vmem>>, %arg2: memref<1x512xf32, #tpu.memory_space<vmem>>) attributes {dimension_semantics = [#tpu.dimension_semantics<parallel>], iteration_bounds = array<i64: 1>, scalar_prefetch = 0 : i64, scratch_operands = 0 : i64, tpu.core_type = #tpu.core_type<tc>, window_params = [{transform_indices = @transform_0, window_bounds = array<i64: 1, 512>}, {transform_indices = @transform_1, window_bounds = array<i64: 1, 512>}]} {
    %c0 = arith.constant 0 : index
    %c0_0 = arith.constant 0 : index
    %0 = vector.load %arg1[%c0, %c0_0] : memref<1x512xf32, #tpu.memory_space<vmem>>, vector<1x512xf32>
    %1 = arith.mulf %0, %0 : vector<1x512xf32>
    %cst = arith.constant 0.0356774069 : f32
    %2 = vector.broadcast %cst : f32 to vector<1x512xf32>
    %3 = arith.mulf %2, %1 : vector<1x512xf32>
    %cst_1 = arith.constant 0.797884583 : f32
    %4 = vector.broadcast %cst_1 : f32 to vector<1x512xf32>
    %5 = arith.addf %4, %3 : vector<1x512xf32>
    %6 = arith.mulf %0, %5 : vector<1x512xf32>
    %cst_2 = arith.constant 5.000000e-01 : f32
    %7 = vector.broadcast %cst_2 : f32 to vector<1x512xf32>
    %8 = arith.mulf %7, %0 : vector<1x512xf32>
    %9 = math.tanh %6 : vector<1x512xf32>
    %cst_3 = arith.constant 1.000000e+00 : f32
    %10 = vector.broadcast %cst_3 : f32 to vector<1x512xf32>
    %11 = arith.addf %10, %9 : vector<1x512xf32>
    %12 = arith.mulf %8, %11 : vector<1x512xf32>
    %c0_4 = arith.constant 0 : index
    %c0_5 = arith.constant 0 : index
    %13 = vector.load %arg2[%c0_4, %c0_5] : memref<1x512xf32, #tpu.memory_space<vmem>>, vector<1x512xf32>
    tpu.vector_store %arg2[%c0_4, %c0_5], %12 {strides = array<i32>} : memref<1x512xf32, #tpu.memory_space<vmem>>, vector<1x512xf32>,
    return
  }
  func.func @transform_0(%arg0: i32) -> (i32, i32) {
    %c0_i32 = arith.constant 0 : i32
    %c0_i32_0 = arith.constant 0 : i32
    return %arg0, %c0_i32 : i32, i32
  }
  func.func @transform_1(%arg0: i32) -> (i32, i32) {
    %c0_i32 = arith.constant 0 : i32
    %c0_i32_0 = arith.constant 0 : i32
    return %arg0, %c0_i32 : i32, i32
  }
}

</mosaic_0001>

<llo_original>
// kernel: tpu_custom_call.1
$region0: #{tpu_custom_call.1}
  #allocation0 [shape = 'u32[]', space=smem, size = 0x4, offset = 0x4, fixed_abs, tag = 'smem constant byte address 0x4 - core index']
  #allocation1 [shape = 'u32[144,128]{1,0:T(1,128)}', space=vmem, size = 0x12000, scoped, tag = 'internal scratch']
  %s0 = inlined_call_operand.hbm [shape: f32[1,512], index: 0, kind: input, shape index: {}]
  %s1 = inlined_call_operand.hbm [shape: f32[1,512], index: 1, kind: output, shape index: {}]
  %s2 = sld [smem:[#allocation0]]
  $region18: #{tpu_custom_call.1} parent=0
    _
  %s4 = ssub.s32 1, %s2
  %s5 = scalar_select 0, %s4, %s2
  $region1: #{tpu_custom_call.1} parent=0
    #allocation2 [shape = 'u8[2048]{0}', space=vmem, size = 0x800, scoped, tag = 'input window, operand 0, single buffered']
    #allocation3 [shape = 's32[1]{0}', space=sflag, size = 0x4, scoped, tag = 'scoped memory for tpu_custom_call.1']
    #allocation4 [shape = 's32[1]{0}', space=sflag, size = 0x4, scoped, tag = 'scoped memory for tpu_custom_call.1']
    #allocation5 [shape = 'u8[2048]{0}', space=vmem, size = 0x800, scoped, tag = 'output window, operand 0, single buffered']
    %6 = vsyncpa [#allocation3], 0
    %7 = vsyncpa [#allocation4], 0
    // Predicated region
    $region2: #{tpu_custom_call.1} parent=1 // pred_check
      _
    $region3: #{tpu_custom_call.1} parent=1 // pred_check_branch
      %9 = sbr.rel (0) target = $region5
    $region4: #{tpu_custom_call.1} parent=1 // pred_region
      %s11 = ssub.s32 64, 64
      %12 = vsyncadd [#allocation3], %s11
      %s14 = sshll.u32 [#allocation2], 4
      %s15 = int_to_ptr.vmem [resolvable:$true] %s14
      %17 = dma.hbm_to_vmem [thread:$0]  %s0, 64, %s15, [#allocation3]
    $region5: #{tpu_custom_call.1} parent=1 // pred_fallthru
      _
    // Predicated region
    $region6: #{tpu_custom_call.1} parent=1 // pred_check
      _
    $region7: #{tpu_custom_call.1} parent=1 // pred_check_branch
      %19 = sbr.rel (0) target = $region9
    $region8: #{tpu_custom_call.1} parent=1 // pred_region
      %20 = dma.done [#allocation3], 64
    $region9: #{tpu_custom_call.1} parent=1 // pred_fallthru
      _
    %v21 = vld [vmem:[#allocation2] sm:$0xf]
    %v22 = vmul.f32 %v21, %v21
    %v23 = vmul.f32 %v22, 0.035677407
    %v24 = vadd.f32 %v23, 0.7978846
    %v25 = vmul.f32 %v21, %v24
    %v26 = vmul.f32 %v21, 0.5
    %v27 = vtanh.pop %v25
    %v28 = vadd.f32 %v27, 1.0
    %v29 = vmul.f32 %v26, %v28
    %v30 = vlaneseq
    %vm31 = vcmp.ge.s32.totalorder %v30, 0
    %vm32 = vcmp.lt.s32.totalorder %v30, 512
    %vm33 = vmand %vm31, %vm32
    %34 = vst.msk [vmem:[#allocation5] sm:$0xf] %vm33, %v29
    // Predicated region
    $region10: #{tpu_custom_call.1} parent=1 // pred_check
      _
    $region11: #{tpu_custom_call.1} parent=1 // pred_check_branch
      %36 = sbr.rel (0) target = $region13
    $region12: #{tpu_custom_call.1} parent=1 // pred_region
      %s38 = ssub.s32 64, 64
      %39 = vsyncadd [#allocation4], %s38
      %s41 = sshll.u32 [#allocation5], 4
      %s42 = int_to_ptr.vmem [resolvable:$true] %s41
      %44 = dma.vmem_to_hbm [thread:$0]  %s42, 64, %s1, [#allocation4]
    $region13: #{tpu_custom_call.1} parent=1 // pred_fallthru
      _
    // Predicated region
    $region14: #{tpu_custom_call.1} parent=1 // pred_check
      _
    $region15: #{tpu_custom_call.1} parent=1 // pred_check_branch
      %46 = sbr.rel (0) target = $region17
    $region16: #{tpu_custom_call.1} parent=1 // pred_region
      %47 = dma.done [#allocation4], 64
    $region17: #{tpu_custom_call.1} parent=1 // pred_fallthru
      _
    %48 = vsyncpa [#allocation3], 1
    %49 = vsyncpa [#allocation4], 1

</llo_original>
